<compile_context>
chip_gen: v7x
topology: tpu7x:2x2x1
jax: 0.10.0
libtpu: 0.0.40
codegen_flags: <defaults>
</compile_context>

<pallas_src>
import functools

import numpy as np

import jax
import jax.numpy as jnp
from jax.experimental import pallas as pl
from jax.experimental.pallas import tpu as pltpu


def _segment_bounds(n_node: int, K: int):
    """Replicates the exact PyTorch loop to get static (start, end) bounds."""
    step = n_node // K
    assert step >= 1, "Readout requires n_node >= K"
    bounds = []
    i = 0
    while i < n_node:
        if n_node - i < 2 * step:
            bounds.append((i, n_node))
            break
        bounds.append((i, i + step))
        i += step
    return bounds


def _readout_kernel(w_ref, z_ref, out_ref, acc_ref, *, inv_counts, d):
    k = pl.program_id(0)

    @pl.when(k == 0)
    def _init():
        acc_ref[...] = jnp.zeros_like(acc_ref)

    # Partial segment sums for this node tile: (S, TN) x (TN, d) on the MXU,
    # f32 accumulation. W and Z stay in their native (possibly bf16) dtype.
    acc_ref[...] += jnp.dot(w_ref[...], z_ref[...],
                            preferred_element_type=jnp.float32)

    @pl.when(k == pl.num_programs(0) - 1)
    def _finalize():
        # Scale by the static 1/count per segment and store lane-dense into
        # the (1, S*d) output (matches the PyTorch cat + view(1, -1)).
        for s, inv_c in enumerate(inv_counts):
            seg = acc_ref[s:s + 1, :] * inv_c            # (1, d) f32, VPU
            out_ref[0:1, s * d:(s + 1) * d] = seg.astype(out_ref.dtype)


def readout(Z: jax.Array, K: int, *, tn: int = 512) -> jax.Array:
    """Pallas implementation of DCRN Readout.forward. Returns (1, S*d)."""
    n_node, d = Z.shape
    bounds = _segment_bounds(n_node, K)
    S = len(bounds)
    inv_counts = tuple(1.0 / (hi - lo) for lo, hi in bounds)

    # Node-axis tiling. TN is the lane dim of W's block and the sublane dim of
    # Z's block, so when tiling (grid > 1) it must be a multiple of 128.
    if n_node <= tn:
        tn = n_node          # single full-extent block (any n_node allowed)
        n_pad = n_node
    else:
        tn = max(128, (tn // 128) * 128)
        n_pad = ((n_node + tn - 1) // tn) * tn
    n_tiles = n_pad // tn

    # Static segment-assignment matrix (0/1), hoisted out of the kernel.
    # Columns >= n_node are zero, so padded rows never contribute.
    W_np = np.zeros((S, n_pad), dtype=np.float32)
    for s, (lo, hi) in enumerate(bounds):
        W_np[s, lo:hi] = 1.0
    W = jnp.asarray(W_np, dtype=Z.dtype)

    # Zero-pad Z only when the last node tile would otherwise read OOB.
    if n_pad != n_node:
        Z_in = jnp.zeros((n_pad, d), dtype=Z.dtype).at[:n_node, :].set(Z)
    else:
        Z_in = Z

    kernel = functools.partial(_readout_kernel, inv_counts=inv_counts, d=d)

    return pl.pallas_call(
        kernel,
        grid=(n_tiles,),
        in_specs=[
            pl.BlockSpec((S, tn), lambda k: (0, k)),   # segment matrix tile
            pl.BlockSpec((tn, d), lambda k: (k, 0)),   # Z node tile
        ],
        out_specs=pl.BlockSpec((1, S * d), lambda k: (0, 0)),
        out_shape=jax.ShapeDtypeStruct((1, S * d), Z.dtype),
        scratch_shapes=[pltpu.VMEM((S, d), jnp.float32)],
        compiler_params=pltpu.CompilerParams(
            dimension_semantics=("arbitrary",),   # node axis is a reduction
            vmem_limit_bytes=32 << 20,            # safe on v5e/v6e/v7x
        ),
    )(W, Z_in)


def readout_reference(Z: jax.Array, K: int) -> jax.Array:
    """Pure-JAX reference replicating the PyTorch loop exactly."""
    n_node = Z.shape[0]
    step = n_node // K
    parts = []
    i = 0
    while i < n_node:
        if n_node - i < 2 * step:
            parts.append(jnp.mean(Z[i:n_node], axis=0))
            break
        parts.append(jnp.mean(Z[i:i + step], axis=0))
        i += step
    return jnp.concatenate(parts, axis=0).reshape(1, -1)


if __name__ == "__main__":
    key = jax.random.PRNGKey(0)
    k1, k2 = jax.random.split(key)

    # Case 1: exercises the tiled reduction pipeline (4 node tiles of 256 rows,
    # last tile padded 1000 -> 1024). K=4, ragged last segment of 250 rows.
    n_node, d, K = 1000, 128, 4
    Z = jax.random.normal(k1, (n_node, d), dtype=jnp.float32)
    out = jax.block_until_ready(readout(Z, K, tn=256))
    ref = readout_reference(Z, K)
    assert out.shape == ref.shape, (out.shape, ref.shape)
    assert jnp.allclose(out, ref, atol=1e-5, rtol=1e-5), "mismatch (tiled case)"

    # Case 2: tiny single-tile path (18 nodes, ragged last segment of 6 rows).
    Z2 = jax.random.normal(k2, (18, 128), dtype=jnp.float32)
    out2 = jax.block_until_ready(readout(Z2, 4))
    ref2 = readout_reference(Z2, 4)
    assert out2.shape == ref2.shape, (out2.shape, ref2.shape)
    assert jnp.allclose(out2, ref2, atol=1e-5, rtol=1e-5), "mismatch (tiny case)"

    print("KERNEL_OK")
</pallas_src>

<mosaic_0001>
module attributes {stable_mosaic.version = 11 : i64} {
  func.func @_readout_kernel(%arg0: i32, %arg1: memref<4x256xf32, #tpu.memory_space<vmem>>, %arg2: memref<256x128xf32, #tpu.memory_space<vmem>>, %arg3: memref<1x512xf32, #tpu.memory_space<vmem>>, %arg4: memref<4x128xf32, #tpu.memory_space<vmem>>) attributes {dimension_semantics = [#tpu.dimension_semantics<arbitrary>], iteration_bounds = array<i64: 4>, scalar_prefetch = 0 : i64, scratch_operands = 1 : i64, tpu.core_type = #tpu.core_type<tc>, window_params = [{transform_indices = @transform_0, window_bounds = array<i64: 4, 256>}, {transform_indices = @transform_1, window_bounds = array<i64: 256, 128>}, {pipeline_mode = #tpu.pipeline_mode<synchronous>, transform_indices = @transform_2, window_bounds = array<i64: 1, 512>}]} {
    %c0_i32 = arith.constant 0 : i32
    %0 = arith.cmpi eq, %arg0, %c0_i32 : i32
    %1 = arith.extui %0 : i1 to i32
    %c0_i32_0 = arith.constant 0 : i32
    %2 = arith.cmpi ne, %1, %c0_i32_0 : i32
    scf.if %2 {
      %cst_9 = arith.constant 0.000000e+00 : f32
      %12 = vector.broadcast %cst_9 : f32 to vector<4x128xf32>
      %c0_10 = arith.constant 0 : index
      %c0_11 = arith.constant 0 : index
      %13 = vector.load %arg4[%c0_10, %c0_11] : memref<4x128xf32, #tpu.memory_space<vmem>>, vector<4x128xf32>
      tpu.vector_store %arg4[%c0_10, %c0_11], %12 {strides = array<i32>} : memref<4x128xf32, #tpu.memory_space<vmem>>, vector<4x128xf32>,
    } else {
    }
    %c0 = arith.constant 0 : index
    %c0_1 = arith.constant 0 : index
    %3 = vector.load %arg4[%c0, %c0_1] : memref<4x128xf32, #tpu.memory_space<vmem>>, vector<4x128xf32>
    %c0_2 = arith.constant 0 : index
    %c0_3 = arith.constant 0 : index
    %4 = vector.load %arg1[%c0_2, %c0_3] : memref<4x256xf32, #tpu.memory_space<vmem>>, vector<4x256xf32>
    %c0_4 = arith.constant 0 : index
    %c0_5 = arith.constant 0 : index
    %5 = vector.load %arg2[%c0_4, %c0_5] : memref<256x128xf32, #tpu.memory_space<vmem>>, vector<256x128xf32>
    %cst = arith.constant dense<0.000000e+00> : vector<4x128xf32>
    %6 = tpu.matmul %4, %5, %cst {dimension_numbers = #tpu.dot_dimension_numbers<[1], [0], [0], [1], [0, 0, 1, 1], [], []>} : vector<4x256xf32>, vector<256x128xf32>, vector<4x128xf32> -> vector<4x128xf32>
    %7 = arith.addf %3, %6 : vector<4x128xf32>
    %c0_6 = arith.constant 0 : index
    %c0_7 = arith.constant 0 : index
    %8 = vector.load %arg4[%c0_6, %c0_7] : memref<4x128xf32, #tpu.memory_space<vmem>>, vector<4x128xf32>
    tpu.vector_store %arg4[%c0_6, %c0_7], %7 {strides = array<i32>} : memref<4x128xf32, #tpu.memory_space<vmem>>, vector<4x128xf32>,
    %c3_i32 = arith.constant 3 : i32
    %9 = arith.cmpi eq, %arg0, %c3_i32 : i32
    %10 = arith.extui %9 : i1 to i32
    %c0_i32_8 = arith.constant 0 : i32
    %11 = arith.cmpi ne, %10, %c0_i32_8 : i32
    scf.if %11 {
      %c0_9 = arith.constant 0 : index
      %c0_10 = arith.constant 0 : index
      %12 = vector.load %arg4[%c0_9, %c0_10] : memref<4x128xf32, #tpu.memory_space<vmem>>, vector<1x128xf32>
      %cst_11 = arith.constant 4.000000e-03 : f32
      %13 = vector.broadcast %cst_11 : f32 to vector<1x128xf32>
      %14 = arith.mulf %12, %13 : vector<1x128xf32>
      %c0_12 = arith.constant 0 : index
      %c0_13 = arith.constant 0 : index
      %15 = vector.load %arg3[%c0_12, %c0_13] : memref<1x512xf32, #tpu.memory_space<vmem>>, vector<1x128xf32>
      tpu.vector_store %arg3[%c0_12, %c0_13], %14 {strides = array<i32>} : memref<1x512xf32, #tpu.memory_space<vmem>>, vector<1x128xf32>,
      %c1 = arith.constant 1 : index
      %c0_14 = arith.constant 0 : index
      %16 = vector.load %arg4[%c1, %c0_14] : memref<4x128xf32, #tpu.memory_space<vmem>>, vector<1x128xf32>
      %cst_15 = arith.constant 4.000000e-03 : f32
      %17 = vector.broadcast %cst_15 : f32 to vector<1x128xf32>
      %18 = arith.mulf %16, %17 : vector<1x128xf32>
      %c0_16 = arith.constant 0 : index
      %c128 = arith.constant 128 : index
      %19 = vector.load %arg3[%c0_16, %c128] : memref<1x512xf32, #tpu.memory_space<vmem>>, vector<1x128xf32>
      tpu.vector_store %arg3[%c0_16, %c128], %18 {strides = array<i32>} : memref<1x512xf32, #tpu.memory_space<vmem>>, vector<1x128xf32>,
      %c2 = arith.constant 2 : index
      %c0_17 = arith.constant 0 : index
      %20 = vector.load %arg4[%c2, %c0_17] : memref<4x128xf32, #tpu.memory_space<vmem>>, vector<1x128xf32>
      %cst_18 = arith.constant 4.000000e-03 : f32
      %21 = vector.broadcast %cst_18 : f32 to vector<1x128xf32>
      %22 = arith.mulf %20, %21 : vector<1x128xf32>
      %c0_19 = arith.constant 0 : index
      %c256 = arith.constant 256 : index
      %23 = vector.load %arg3[%c0_19, %c256] : memref<1x512xf32, #tpu.memory_space<vmem>>, vector<1x128xf32>
      tpu.vector_store %arg3[%c0_19, %c256], %22 {strides = array<i32>} : memref<1x512xf32, #tpu.memory_space<vmem>>, vector<1x128xf32>,
      %c3 = arith.constant 3 : index
      %c0_20 = arith.constant 0 : index
      %24 = vector.load %arg4[%c3, %c0_20] : memref<4x128xf32, #tpu.memory_space<vmem>>, vector<1x128xf32>
      %cst_21 = arith.constant 4.000000e-03 : f32
      %25 = vector.broadcast %cst_21 : f32 to vector<1x128xf32>
      %26 = arith.mulf %24, %25 : vector<1x128xf32>
      %c0_22 = arith.constant 0 : index
      %c384 = arith.constant 384 : index
      %27 = vector.load %arg3[%c0_22, %c384] : memref<1x512xf32, #tpu.memory_space<vmem>>, vector<1x128xf32>
      tpu.vector_store %arg3[%c0_22, %c384], %26 {strides = array<i32>} : memref<1x512xf32, #tpu.memory_space<vmem>>, vector<1x128xf32>,
    } else {
    }
    return
  }
  func.func @transform_0(%arg0: i32) -> (i32, i32) {
    %c0_i32 = arith.constant 0 : i32
    %c0_i32_0 = arith.constant 0 : i32
    return %c0_i32, %arg0 : i32, i32
  }
  func.func @transform_1(%arg0: i32) -> (i32, i32) {
    %c0_i32 = arith.constant 0 : i32
    %c0_i32_0 = arith.constant 0 : i32
    return %arg0, %c0_i32 : i32, i32
  }
  func.func @transform_2(%arg0: i32) -> (i32, i32) {
    %c0_i32 = arith.constant 0 : i32
    %c0_i32_0 = arith.constant 0 : i32
    %c0_i32_1 = arith.constant 0 : i32
    return %c0_i32, %c0_i32_0 : i32, i32
  }
}

</mosaic_0001>

<llo_original>
// kernel: tpu_custom_call.1
$region0: #{tpu_custom_call.1}
  #allocation0 [shape = 'u32[]', space=smem, size = 0x4, offset = 0x4, fixed_abs, tag = 'smem constant byte address 0x4 - core index']
  #allocation1 [shape = 'u32[144,128]{1,0:T(1,128)}', space=vmem, size = 0x12000, scoped, tag = 'internal scratch']
  #allocation2 [shape = 'f32[4,128]{1,0:T(4,128)}', space=vmem, size = 0x800, scoped, tag = 'scratch operand']
  %s0 = inlined_call_operand.hbm [shape: f32[4,1024], index: 0, kind: input, shape index: {}]
  %s1 = inlined_call_operand.hbm [shape: f32[1024,128], index: 1, kind: input, shape index: {}]
  %s2 = inlined_call_operand.hbm [shape: f32[1,512], index: 2, kind: output, shape index: {}]
  %s3 = sld [smem:[#allocation0]]
  $region57: #{tpu_custom_call.1} parent=0
    _
  %s5 = ssub.s32 1, %s3
  %s6 = scalar_select 0, %s5, %s3
  $region1: #{tpu_custom_call.1} parent=0
    #allocation3 [shape = 'u8[8192]{0}', space=vmem, size = 0x2000, scoped, tag = 'input window, operand 0']
    #allocation4 [shape = 's32[2]{0}', space=sflag, size = 0x8, scoped, tag = 'scoped memory for tpu_custom_call.1']
    #allocation5 [shape = 's32[2]{0}', space=sflag, size = 0x8, scoped, tag = 'scoped memory for tpu_custom_call.1']
    #allocation6 [shape = 'u8[262144]{0}', space=vmem, size = 0x40000, scoped, tag = 'input window, operand 1']
    #allocation7 [shape = 's32[2]{0}', space=sflag, size = 0x8, scoped, tag = 'scoped memory for tpu_custom_call.1']
    #allocation8 [shape = 'u8[2048]{0}', space=vmem, size = 0x800, scoped, tag = 'output window, operand 0, single buffered']
    %7 = vsyncpa [#allocation4], 0
    %s8 = scalar_lea.sflag [#allocation4], 1
    %9 = vsyncpa %s8, 0
    %10 = vsyncpa [#allocation7], 0
    %s11 = scalar_lea.sflag [#allocation7], 1
    %12 = vsyncpa %s11, 0
    %13 = vsyncpa [#allocation5], 0
    loop: start=0, step=1, limit=6
    $region2: #{tpu_custom_call.1} parent=1 // loop_pre_header
      _
    $region3: #{tpu_custom_call.1} parent=1 // loop_header
      %s15 = sphi 0, %s19
      %p16 = scmp.ge.s32.totalorder %s15, 6
      %s25 = sphi 0, %s27
      %s28 = sphi 0, %s25
      %s29 = sphi 0, %s28
      %s45 = sphi 0, %s29
      %s51 = sphi 0, %s53
      %s54 = sphi 0, %s51
      %s55 = sphi 0, %s54
      %s71 = sphi 0, %s55
      %s75 = sphi 0, %s75
      %s77 = sphi 0, %s75
      %s78 = sphi 0, %s77
      %s92 = sphi 0, %s78
    $region4: #{tpu_custom_call.1} parent=1 // loop_header_branch
      %18 = sbr.rel (%p16) target = $region8
    $region5: #{tpu_custom_call.1} parent=1 // loop_body
      %s20 = ssub.s32 %s15, 1
      %s21 = ssub.s32 %s15, 2
      %s22 = sadd.s32 %s15, 1
      %s23 = ssub.s32 %s15, %s22
      %p24 = scmp.eq.s32.totalorder %s23, 0
      %s26 = sadd.s32 %s25, 1
      %s27 = scalar_select %p24, %s25, %s26
      %p30 = pneg %p24
      %p31 = scmp.eq.s32.totalorder %s15, 3
      %p32 = por %p30, %p31
      %p33 = scmp.ne.s32.totalorder %s25, %s28
      %p34 = scmp.eq.s32.totalorder %s15, 0
      %p35 = por %p33, %p34
      %p36 = scmp.ne.s32.totalorder %s25, %s28
      %p37 = scmp.eq.s32.totalorder %s20, 3
      %p38 = por %p36, %p37
      %p39 = scmp.ne.s32.totalorder %s28, %s29
      %p40 = scmp.eq.s32.totalorder %s20, 0
      %p41 = por %p39, %p40
      %p42 = scmp.ne.s32.totalorder %s28, %s29
      %p43 = scmp.eq.s32.totalorder %s21, 3
      %p44 = por %p42, %p43
      %p46 = scmp.ne.s32.totalorder %s29, %s45
      %p47 = scmp.eq.s32.totalorder %s21, 0
      %p48 = por %p46, %p47
      %s49 = ssub.s32 %s15, %s22
      %p50 = scmp.eq.s32.totalorder %s49, 0
      %s52 = sadd.s32 %s51, 1
      %s53 = scalar_select %p50, %s51, %s52
      %p56 = pneg %p50
      %p57 = scmp.eq.s32.totalorder %s15, 3
      %p58 = por %p56, %p57
      %p59 = scmp.ne.s32.totalorder %s51, %s54
      %p60 = scmp.eq.s32.totalorder %s15, 0
      %p61 = por %p59, %p60
      %p62 = scmp.ne.s32.totalorder %s51, %s54
      %p63 = scmp.eq.s32.totalorder %s20, 3
      %p64 = por %p62, %p63
      %p65 = scmp.ne.s32.totalorder %s54, %s55
      %p66 = scmp.eq.s32.totalorder %s20, 0
      %p67 = por %p65, %p66
      %p68 = scmp.ne.s32.totalorder %s54, %s55
      %p69 = scmp.eq.s32.totalorder %s21, 3
      %p70 = por %p68, %p69
      %p72 = scmp.ne.s32.totalorder %s55, %s71
      %p73 = scmp.eq.s32.totalorder %s21, 0
      %p74 = por %p72, %p73
      %s76 = sadd.s32 %s75, 1
      %p79 = scmp.eq.s32.totalorder %s15, 3
      %p80 = scmp.ne.s32.totalorder %s75, %s77
      %p81 = scmp.eq.s32.totalorder %s15, 0
      %p82 = por %p80, %p81
      %p83 = scmp.ne.s32.totalorder %s75, %s77
      %p84 = scmp.eq.s32.totalorder %s20, 3
      %p85 = por %p83, %p84
      %p86 = scmp.ne.s32.totalorder %s77, %s78
      %p87 = scmp.eq.s32.totalorder %s20, 0
      %p88 = por %p86, %p87
      %p89 = scmp.ne.s32.totalorder %s77, %s78
      %p90 = scmp.eq.s32.totalorder %s21, 3
      %p91 = por %p89, %p90
      %p93 = scmp.ne.s32.totalorder %s78, %s92
      %p94 = scmp.eq.s32.totalorder %s21, 0
      %p95 = por %p93, %p94
      %p96 = scmp.le.s32.totalorder 1, %s15
      %p97 = scmp.lt.s32.totalorder %s15, 5
      %p98 = pnand %p96, %p97
      %p99 = pneg %p98
      // Predicated region
      $region9: #{tpu_custom_call.1} parent=5 // pred_check
        _
      $region10: #{tpu_custom_call.1} parent=5 // pred_check_branch
        %101 = sbr.rel (%p98) target = $region12
      $region11: #{tpu_custom_call.1} parent=5 // pred_region
        %s102 = ssub.s32 %s15, 1
      $region12: #{tpu_custom_call.1} parent=5 // pred_fallthru
        _
      %p103 = scmp.lt.s32.totalorder %s15, 4
      // Predicated region
      $region13: #{tpu_custom_call.1} parent=5 // pred_check
        %p104 = pneg %p103
      $region14: #{tpu_custom_call.1} parent=5 // pred_check_branch
        %106 = sbr.rel (%p104) target = $region16
      $region15: #{tpu_custom_call.1} parent=5 // pred_region
        // Predicated region
        $region17: #{tpu_custom_call.1} parent=15 // pred_check
          %p107 = pneg %p35
        $region18: #{tpu_custom_call.1} parent=15 // pred_check_branch
          %109 = sbr.rel (%p107) target = $region20
        $region19: #{tpu_custom_call.1} parent=15 // pred_region
          %s110 = sand.u32 %s25, 1
          %s111 = scalar_lea.sflag [#allocation4], %s110
          %s112 = sand.u32 %s25, 1
          %s113 = smul.addr %s112, 8
          %s114 = scalar_lea.vmem [#allocation3], %s113
          %s115 = smul.u32 2, %s15
          %s117 = ssub.s32 128, 128
          %118 = vsyncadd %s111, %s117
          %s119 = smul.addr %s115, 64
          %s120 = scalar_lea.hbm %s0, %s119
          %s122 = sshll.u32 %s114, 4
          %s123 = int_to_ptr.vmem [resolvable:$true] %s122
          %125 = dma.hbm_to_vmem [thread:$0]  %s120, 128, %s123, %s111
        $region20: #{tpu_custom_call.1} parent=15 // pred_fallthru
          _
        // Predicated region
        $region21: #{tpu_custom_call.1} parent=15 // pred_check
          %p126 = pneg %p61
        $region22: #{tpu_custom_call.1} parent=15 // pred_check_branch
          %128 = sbr.rel (%p126) target = $region24
        $region23: #{tpu_custom_call.1} parent=15 // pred_region
          %s129 = sand.u32 %s51, 1
          %s130 = scalar_lea.sflag [#allocation7], %s129
          %s131 = sand.u32 %s51, 1
          %s132 = smul.addr %s131, 256
          %s133 = scalar_lea.vmem [#allocation6], %s132
          %s134 = smul.u32 32, %s15
          %s136 = ssub.s32 4096, 4096
          %137 = vsyncadd %s130, %s136
          %s138 = smul.addr %s134, 128
          %s139 = scalar_lea.hbm %s1, %s138
          %s140 = sshll.u32 %s133, 4
          %s141 = int_to_ptr.vmem [resolvable:$true] %s140
          %146 = dma.hbm_to_vmem [thread:$0]  %s139, 4096, %s141, %s130, 128, 128, 8
        $region24: #{tpu_custom_call.1} parent=15 // pred_fallthru
          _
      $region16: #{tpu_custom_call.1} parent=5 // pred_fallthru
        _
      %p147 = scmp.le.s32.totalorder 1, %s15
      %p148 = scmp.lt.s32.totalorder %s15, 5
      %p149 = pnand %p147, %p148
      %p150 = pneg %p149
      // Predicated region
      $region25: #{tpu_custom_call.1} parent=5 // pred_check
        _
      $region26: #{tpu_custom_call.1} parent=5 // pred_check_branch
        %152 = sbr.rel (%p149) target = $region28
      $region27: #{tpu_custom_call.1} parent=5 // pred_region
        %s153 = ssub.s32 %s15, 1
        %s154 = sand.u32 %s28, 1
        %s155 = scalar_lea.sflag [#allocation4], %s154
        %s156 = sand.u32 %s28, 1
        %s157 = smul.addr %s156, 8
        %s158 = scalar_lea.vmem [#allocation3], %s157
        // Predicated region
        $region29: #{tpu_custom_call.1} parent=27 // pred_check
          %p159 = pneg %p41
        $region30: #{tpu_custom_call.1} parent=27 // pred_check_branch
          %161 = sbr.rel (%p159) target = $region32
        $region31: #{tpu_custom_call.1} parent=27 // pred_region
          %162 = dma.done %s155, 128
        $region32: #{tpu_custom_call.1} parent=27 // pred_fallthru
          _
        %s163 = sand.u32 %s54, 1
        %s164 = scalar_lea.sflag [#allocation7], %s163
        %s165 = sand.u32 %s54, 1
        %s166 = smul.addr %s165, 256
        %s167 = scalar_lea.vmem [#allocation6], %s166
        // Predicated region
        $region33: #{tpu_custom_call.1} parent=27 // pred_check
          %p168 = pneg %p67
        $region34: #{tpu_custom_call.1} parent=27 // pred_check_branch
          %170 = sbr.rel (%p168) target = $region36
        $region35: #{tpu_custom_call.1} parent=27 // pred_region
          %171 = dma.done %s164, 4096
        $region36: #{tpu_custom_call.1} parent=27 // pred_fallthru
          _
        %s172 = sand.u32 %s28, 1
        %s173 = scalar_lea.sflag [#allocation4], %s172
        %s174 = sand.u32 %s28, 1
        %s175 = smul.addr %s174, 8
        %s176 = scalar_lea.vmem [#allocation3], %s175
        %p177 = pneg %p41
        %p178 = pneg %p38
        %s179 = sand.u32 %s54, 1
        %s180 = scalar_lea.sflag [#allocation7], %s179
        %s181 = sand.u32 %s54, 1
        %s182 = smul.addr %s181, 256
        %s183 = scalar_lea.vmem [#allocation6], %s182
        %p184 = pneg %p67
        %p185 = pneg %p64
        %p186 = pneg %p88
        %p187 = pneg %p85
        %s188 = smul.u32 2, %s20
        %s189 = smul.u32 32, %s20
        %p190 = scmp.eq.s32.totalorder %s20, 0
        // Predicated region
        $region37: #{tpu_custom_call.1} parent=27 // pred_check
          %p191 = pneg %p190
        $region38: #{tpu_custom_call.1} parent=27 // pred_check_branch
          %193 = sbr.rel (%p191) target = $region40
        $region39: #{tpu_custom_call.1} parent=27 // pred_region
          %194 = vst [vmem:[#allocation2] sm:$0xf] 0.0
        $region40: #{tpu_custom_call.1} parent=27 // pred_fallthru
          _
        %v195 = vld [vmem:[#allocation2] sm:$0xf]
        %v196 = vld [vmem:[%s158] sm:$0xff]
        %v197 = vld [vmem:[%s167] sm:$0xff]
        %v198 = vld [vmem:[%s167 + $0x8] sm:$0xff]
        %v199 = vld [vmem:[%s167 + $0x10] sm:$0xff]
        %v200 = vld [vmem:[%s167 + $0x18] sm:$0xff]
        %v201 = vld [vmem:[%s167 + $0x20] sm:$0xff]
        %v202 = vld [vmem:[%s167 + $0x28] sm:$0xff]
        %v203 = vld [vmem:[%s167 + $0x30] sm:$0xff]
        %v204 = vld [vmem:[%s167 + $0x38] sm:$0xff]
        %v205 = vld [vmem:[%s167 + $0x40] sm:$0xff]
        %v206 = vld [vmem:[%s167 + $0x48] sm:$0xff]
        %v207 = vld [vmem:[%s167 + $0x50] sm:$0xff]
        %v208 = vld [vmem:[%s167 + $0x58] sm:$0xff]
        %v209 = vld [vmem:[%s167 + $0x60] sm:$0xff]
        %v210 = vld [vmem:[%s167 + $0x68] sm:$0xff]
        %v211 = vld [vmem:[%s167 + $0x70] sm:$0xff]
        %v212 = vld [vmem:[%s167 + $0x78] sm:$0xff]
        %v213 = vld [vmem:[%s167 + $0x80] sm:$0xff]
        %v214 = vld [vmem:[%s167 + $0x88] sm:$0xff]
        %v215 = vld [vmem:[%s167 + $0x90] sm:$0xff]
        %v216 = vld [vmem:[%s167 + $0x98] sm:$0xff]
        %v217 = vld [vmem:[%s167 + $0xa0] sm:$0xff]
        %v218 = vld [vmem:[%s167 + $0xa8] sm:$0xff]
        %v219 = vld [vmem:[%s167 + $0xb0] sm:$0xff]
        %v220 = vld [vmem:[%s167 + $0xb8] sm:$0xff]
        %v221 = vld [vmem:[%s167 + $0xc0] sm:$0xff]
        %v222 = vld [vmem:[%s167 + $0xc8] sm:$0xff]
        %v223 = vld [vmem:[%s167 + $0xd0] sm:$0xff]
        %v224 = vld [vmem:[%s167 + $0xd8] sm:$0xff]
        %v225 = vld [vmem:[%s167 + $0xe0] sm:$0xff]
        %v226 = vld [vmem:[%s167 + $0xe8] sm:$0xff]
        %v227 = vld [vmem:[%s167 + $0xf0] sm:$0xff]
        %v228 = vld [vmem:[%s167 + $0xf8] sm:$0xff]
        %v230 = vcombine.high %v196, %v196
        %232 = vmatprep.subr.mxu0 0.0
        %233 = vmatpush1.msra.mxu0 %v197
        %234 = vmatprep.subr.mxu0 0.0
        %235 = vmatpush1.msra.mxu0 %v198
        %236 = vmatprep.subr.mxu0 0.0
        %237 = vmatpush1.msra.mxu0 %v199
        %238 = vmatprep.subr.mxu0 0.0
        %239 = vmatpush1.msra.mxu0 %v200
        %240 = vmatprep.subr.mxu0 0.0
        %241 = vmatpush1.msra.mxu0 %v201
        %242 = vmatprep.subr.mxu0 0.0
        %243 = vmatpush1.msra.mxu0 %v202
        %244 = vmatprep.subr.mxu0 0.0
        %245 = vmatpush1.msra.mxu0 %v203
        %246 = vmatprep.subr.mxu0 0.0
        %247 = vmatpush1.msra.mxu0 %v204
        %248 = vmatprep.subr.mxu0 0.0
        %249 = vmatpush1.msra.mxu0 %v205
        %250 = vmatprep.subr.mxu0 0.0
        %251 = vmatpush1.msra.mxu0 %v206
        %252 = vmatprep.subr.mxu0 0.0
        %253 = vmatpush1.msra.mxu0 %v207
        %254 = vmatprep.subr.mxu0 0.0
        %255 = vmatpush1.msra.mxu0 %v208
        %256 = vmatprep.subr.mxu0 0.0
        %257 = vmatpush1.msra.mxu0 %v209
        %258 = vmatprep.subr.mxu0 0.0
        %259 = vmatpush1.msra.mxu0 %v210
        %260 = vmatprep.subr.mxu0 0.0
        %261 = vmatpush1.msra.mxu0 %v211
        %262 = vmatprep.subr.mxu0 0.0
        %263 = vmatpush1.msra.mxu0 %v212
        %264 = vmatprep.subr.mxu0 0.0
        %265 = vmatpush1.msra.mxu0 %v213
        %266 = vmatprep.subr.mxu0 0.0
        %267 = vmatpush1.msra.mxu0 %v214
        %268 = vmatprep.subr.mxu0 0.0
        %269 = vmatpush1.msra.mxu0 %v215
        %270 = vmatprep.subr.mxu0 0.0
        %271 = vmatpush1.msra.mxu0 %v216
        %272 = vmatprep.subr.mxu0 0.0
        %273 = vmatpush1.msra.mxu0 %v217
        %274 = vmatprep.subr.mxu0 0.0
        %275 = vmatpush1.msra.mxu0 %v218
        %276 = vmatprep.subr.mxu0 0.0
        %277 = vmatpush1.msra.mxu0 %v219
        %278 = vmatprep.subr.mxu0 0.0
        %279 = vmatpush1.msra.mxu0 %v220
        %280 = vmatprep.subr.mxu0 0.0
        %281 = vmatpush1.msra.mxu0 %v221
        %282 = vmatprep.subr.mxu0 0.0
        %283 = vmatpush1.msra.mxu0 %v222
        %284 = vmatprep.subr.mxu0 0.0
        %285 = vmatpush1.msra.mxu0 %v223
        %286 = vmatprep.subr.mxu0 0.0
        %287 = vmatpush1.msra.mxu0 %v224
        %288 = vmatprep.subr.mxu0 0.0
        %289 = vmatpush1.msra.mxu0 %v225
        %290 = vmatprep.subr.mxu0 0.0
        %291 = vmatpush1.msra.mxu0 %v226
        %292 = vmatprep.subr.mxu0 0.0
        %293 = vmatpush1.msra.mxu0 %v227
        %294 = vmatprep.subr.mxu0 0.0
        %295 = vmatpush1.msra.mxu0 %v228
        %296 = vmatprep.mubr.f32.mxu0 %v230
        %297 = vmatmul.mubr.f32.gmra.mrb[0].mxu0 %v196
        %v298 = vpop.f32.mrb[0].mxu0
        %v299 = vadd.f32 0.0, %v298
        %v300 = vpop.f32.mrb[0].mxu0
        %301 = vdwg.mxu0
        %v302 = vadd.f32 %v195, %v299
        %303 = vst [vmem:[#allocation2] sm:$0xf] %v302
        %p304 = scmp.eq.s32.totalorder %s20, 3
        // Predicated region
        $region41: #{tpu_custom_call.1} parent=27 // pred_check
          %p305 = pneg %p304
        $region42: #{tpu_custom_call.1} parent=27 // pred_check_branch
          %307 = sbr.rel (%p305) target = $region44
        $region43: #{tpu_custom_call.1} parent=27 // pred_region
          %v308 = vld [vmem:[#allocation2] sm:$0x1]
          %v309 = vmul.f32 %v308, 0.004
          %v310 = vlaneseq
          %vm311 = vcmp.ge.s32.totalorder %v310, 0
          %vm312 = vcmp.lt.s32.totalorder %v310, 128
          %vm313 = vmand %vm311, %vm312
          %314 = vst.msk [vmem:[#allocation8] sm:$0x1] %vm313, %v309
          %v315 = vld [vmem:[#allocation2 + $0x1] sm:$0x1]
          %v316 = vmul.f32 %v315, 0.004
          %317 = vst.msk [vmem:[#allocation8 + $0x1] sm:$0x1] %vm313, %v316
          %v318 = vld [vmem:[#allocation2 + $0x2] sm:$0x1]
          %v319 = vmul.f32 %v318, 0.004
          %320 = vst.msk [vmem:[#allocation8 + $0x2] sm:$0x1] %vm313, %v319
          %v321 = vld [vmem:[#allocation2 + $0x3] sm:$0x1]
          %v322 = vmul.f32 %v321, 0.004
          %323 = vst.msk [vmem:[#allocation8 + $0x3] sm:$0x1] %vm313, %v322
        $region44: #{tpu_custom_call.1} parent=27 // pred_fallthru
          _
        // Predicated region
        $region45: #{tpu_custom_call.1} parent=27 // pred_check
          %p324 = pneg %p85
        $region46: #{tpu_custom_call.1} parent=27 // pred_check_branch
          %326 = sbr.rel (%p324) target = $region48
        $region47: #{tpu_custom_call.1} parent=27 // pred_region
          %s328 = ssub.s32 64, 64
          %329 = vsyncadd [#allocation5], %s328
          %s331 = sshll.u32 [#allocation8], 4
          %s332 = int_to_ptr.vmem [resolvable:$true] %s331
          %334 = dma.vmem_to_hbm [thread:$0]  %s332, 64, %s2, [#allocation5]
        $region48: #{tpu_custom_call.1} parent=27 // pred_fallthru
          _
        // Predicated region
        $region49: #{tpu_custom_call.1} parent=27 // pred_check
          %p335 = pneg %p85
        $region50: #{tpu_custom_call.1} parent=27 // pred_check_branch
          %337 = sbr.rel (%p335) target = $region52
        $region51: #{tpu_custom_call.1} parent=27 // pred_region
          %338 = dma.done [#allocation5], 64
        $region52: #{tpu_custom_call.1} parent=27 // pred_fallthru
          _
      $region28: #{tpu_custom_call.1} parent=5 // pred_fallthru
        _
      %p339 = scmp.le.s32.totalorder 2, %s15
      // Predicated region
      $region53: #{tpu_custom_call.1} parent=5 // pred_check
        %p340 = pneg %p339
      $region54: #{tpu_custom_call.1} parent=5 // pred_check_branch
        %342 = sbr.rel (%p340) target = $region56
      $region55: #{tpu_custom_call.1} parent=5 // pred_region
        %s343 = ssub.s32 %s15, 2
      $region56: #{tpu_custom_call.1} parent=5 // pred_fallthru
        _
    $region6: #{tpu_custom_call.1} parent=1 // loop_footer
      %s19 = sadd.s32 1, %s15
    $region7: #{tpu_custom_call.1} parent=1 // loop_footer_branch
      %14 = sbr.rel target = $region3
    $region8: #{tpu_custom_call.1} parent=1 // loop_exit
      _
    %344 = vsyncpa [#allocation4], 1
    %s345 = scalar_lea.sflag [#allocation4], 1
    %346 = vsyncpa %s345, 1
    %347 = vsyncpa [#allocation7], 1
    %s348 = scalar_lea.sflag [#allocation7], 1
    %349 = vsyncpa %s348, 1
    %350 = vsyncpa [#allocation5], 1
    %s351 = scalar_lea.sflag [#allocation5], 1
    %352 = vsyncpa %s351, 1

</llo_original>
